<compile_context>
chip_gen: v6e
topology: v6e:2x2x1
jax: 0.10.0
libtpu: 0.0.40
codegen_flags: <defaults>
</compile_context>

<pallas_src>
import functools

import jax
import jax.numpy as jnp
from jax.experimental import pallas as pl
from jax.experimental.pallas import tpu as pltpu


def conv_stats_kernel(x_ref, w_ref, y_ref, sum_ref, m2_ref, *, inv_rows):
    """One grid step = one (image, spatial tile): im2col matmul + BN partial statistics."""
    # Single MXU contraction: (O, 9C) x (9C, R) -> (O, R), accumulated in f32.
    acc = jnp.dot(w_ref[...], x_ref[0], preferred_element_type=jnp.float32)

    # Per-(image, tile) BatchNorm partials in f32: sum and mean-centered second moment.  Centered
    # M2 + Chan's combine (epilogue) avoids E[x^2]-E[x]^2 cancellation, and per-block outputs keep
    # both grid axes "parallel" (no cross-step accumulator).
    s = jnp.sum(acc, axis=1, keepdims=True)                    # (O, 1)  XLU lane-reduce
    centered = acc - s * inv_rows
    m2 = jnp.sum(centered * centered, axis=1, keepdims=True)   # (O, 1)
    sum_ref[0, 0] = s
    m2_ref[0, 0] = m2

    # Lane-dense store: minor dim R is a multiple of 128 (or the whole plane) -> unmasked vst.
    y_ref[0] = acc.astype(y_ref.dtype)


def _choose_tile_rows(rows, k, o, y_itemsize, budget_bytes=40 * 2**20):
    """Static spatial-tile chooser: largest multiple-of-128 divisor of H*W whose double-buffered
    working set fits the VMEM budget; prefers >= 2 tiles per image (v7x has two TensorCores)."""
    cands = [r for r in range(128, rows + 1, 128) if rows % r == 0]
    if not cands:
        return rows                       # tiny/odd plane: single tile (stores may be masked)

    def step_bytes(r):
        return 2 * k * r * 4 + 2 * o * r * y_itemsize + 2 * k * o * 4 + 4 * o * 8

    fitting = [r for r in cands if step_bytes(r) <= budget_bytes] or [cands[0]]
    r = max(fitting)
    if r == rows and rows >= 256:         # keep >= 2 spatial tiles so the 2nd TC has work
        smaller = [c for c in fitting if c <= rows // 2]
        if smaller:
            r = max(smaller)
    return r


def _conv_stats(xcol, w2, *, tile_rows, y_dtype):
    """One Pallas pass: conv output in channel-major (N, O, H*W) + per-tile BN partials."""
    N, K, HW = xcol.shape
    O = w2.shape[0]
    T = HW // tile_rows

    kern = functools.partial(conv_stats_kernel, inv_rows=1.0 / tile_rows)
    y, s, m2 = pl.pallas_call(
        kern,
        out_shape=(jax.ShapeDtypeStruct((N, O, HW), y_dtype),
                   jax.ShapeDtypeStruct((N, T, O, 1), jnp.float32),
                   jax.ShapeDtypeStruct((N, T, O, 1), jnp.float32)),
        grid=(N, T),
        in_specs=[pl.BlockSpec((1, K, tile_rows), lambda n, t: (n, 0, t)),
                  pl.BlockSpec((O, K), lambda n, t: (0, 0))],
        out_specs=(pl.BlockSpec((1, O, tile_rows), lambda n, t: (n, 0, t)),
                   pl.BlockSpec((1, 1, O, 1), lambda n, t: (n, t, 0, 0)),
                   pl.BlockSpec((1, 1, O, 1), lambda n, t: (n, t, 0, 0))),
        compiler_params=pltpu.CompilerParams(
            dimension_semantics=("parallel", "parallel"),   # per-block outputs only
            vmem_limit_bytes=48 * 2**20),                   # above scoped default, < v7x 64 MiB
    )(xcol, w2)
    return y, s[..., 0], m2[..., 0]        # stats as (N, T, O)


@functools.partial(jax.jit, static_argnames=("dirate", "eps", "y_dtype"))
def conv_bn_relu(x_nchw, w_hwio, bias, gamma, beta, *, dirate, eps=1e-5,
                 y_dtype=jnp.bfloat16):
    """Forward of ConvBNReluBlock. x_nchw: (N, C, H, W) f32 -> (N, O, H, W) f32."""
    del bias  # Conv bias cancels exactly in (y - mean) under batch-stats BatchNorm.
    N, C, H, W = x_nchw.shape
    KH, KW, _, O = w_hwio.shape
    d = int(dirate)

    # Fused XLA producer: zero-pad + dilated KHxKW im2col, channel-major so the kernel's minor
    # dim is lane-dense flattened spatial and the result is already NCHW-ordered.
    xp = jnp.pad(x_nchw, ((0, 0), (0, 0), (d, d), (d, d)))
    taps = [xp[:, :, ky * d:ky * d + H, kx * d:kx * d + W]
            for ky in range(KH) for kx in range(KW)]
    xcol = jnp.concatenate(taps, axis=1).reshape(N, KH * KW * C, H * W)
    w2 = jnp.transpose(w_hwio, (3, 0, 1, 2)).reshape(O, KH * KW * C)

    R = _choose_tile_rows(H * W, KH * KW * C, O, jnp.dtype(y_dtype).itemsize)
    y, s, m2 = _conv_stats(xcol, w2, tile_rows=R, y_dtype=y_dtype)

    # Fused XLA epilogue: Chan combine of per-(image, tile) partials, normalize, ReLU.  No
    # transpose needed -- y is already channel-major.
    m_total = N * H * W
    mean_nt = s / jnp.float32(R)                              # (N, T, O) per-tile means
    mean = jnp.sum(s, axis=(0, 1)) / m_total                  # (O,)
    m2_tot = (jnp.sum(m2, axis=(0, 1))
              + jnp.float32(R) * jnp.sum((mean_nt - mean) ** 2, axis=(0, 1)))
    var = m2_tot / m_total                                    # biased, as in PyTorch BN forward
    scale = gamma * jax.lax.rsqrt(var + eps)
    shift = beta - mean * scale
    out = jnp.maximum(y.astype(jnp.float32) * scale[None, :, None] + shift[None, :, None], 0.0)
    return out.reshape(N, O, H, W)


def reference(x_nchw, w_hwio, bias, gamma, beta, dirate, eps=1e-5):
    d = int(dirate)
    O = w_hwio.shape[-1]
    conv = jax.lax.conv_general_dilated(
        x_nchw, w_hwio, window_strides=(1, 1),
        padding=((d, d), (d, d)), rhs_dilation=(d, d),
        dimension_numbers=('NCHW', 'HWIO', 'NCHW')) + bias.reshape(1, O, 1, 1)
    m = conv.mean(axis=(0, 2, 3), keepdims=True)
    v = conv.var(axis=(0, 2, 3), keepdims=True)               # biased, as in PyTorch BN forward
    y = (conv - m) * jax.lax.rsqrt(v + eps) * gamma.reshape(1, O, 1, 1) \
        + beta.reshape(1, O, 1, 1)
    return jnp.maximum(y, 0.0)


if __name__ == "__main__":
    key = jax.random.PRNGKey(0)
    k_x, k_w, k_b, k_g, k_bt = jax.random.split(key, 5)

    N, C, O, H, W = 2, 4, 8, 16, 16
    x = jax.random.normal(k_x, (N, C, H, W), jnp.float32)

    # deterministic synthetic parameters (shapes per nn.Conv2d(C, O, 3) / nn.BatchNorm2d(O))
    fan_in = C * 3 * 3
    bound = 1.0 / jnp.sqrt(fan_in)
    w_hwio = jax.random.uniform(k_w, (3, 3, C, O), jnp.float32, -bound, bound)
    bias = jax.random.uniform(k_b, (O,), jnp.float32, -bound, bound)
    gamma = 1.0 + 0.1 * jax.random.normal(k_g, (O,), jnp.float32)
    beta = 0.1 * jax.random.normal(k_bt, (O,), jnp.float32)

    for dirate in (1, 2):
        ref = reference(x, w_hwio, bias, gamma, beta, dirate)

        # f32 intermediate path: tight check of the exact forward semantics (incl. bias
        # cancellation under batch-stats BN).
        out32 = jax.block_until_ready(
            conv_bn_relu(x, w_hwio, bias, gamma, beta, dirate=dirate, y_dtype=jnp.float32))
        assert out32.shape == (N, O, H, W)
        err32 = float(jnp.max(jnp.abs(out32 - ref)))
        assert jnp.allclose(out32, ref, atol=1e-4, rtol=1e-4), \
            f"f32 mismatch at dirate={dirate}: max err {err32}"

        # Default bf16 intermediate path (halves the y HBM round trip): looser tolerance.
        out16 = jax.block_until_ready(
            conv_bn_relu(x, w_hwio, bias, gamma, beta, dirate=dirate))
        err16 = float(jnp.max(jnp.abs(out16 - ref)))
        assert jnp.allclose(out16, ref, atol=3e-2, rtol=3e-2), \
            f"bf16 mismatch at dirate={dirate}: max err {err16}"

    print("KERNEL_OK")
</pallas_src>

<mosaic_0001>
module attributes {stable_mosaic.version = 11 : i64} {
  func.func @conv_stats_kernel(%arg0: i32, %arg1: i32, %arg2: memref<1x36x128xf32, #tpu.memory_space<vmem>>, %arg3: memref<8x36xf32, #tpu.memory_space<vmem>>, %arg4: memref<1x8x128xf32, #tpu.memory_space<vmem>>, %arg5: memref<1x1x8x1xf32, #tpu.memory_space<vmem>>, %arg6: memref<1x1x8x1xf32, #tpu.memory_space<vmem>>) attributes {dimension_semantics = [#tpu.dimension_semantics<parallel>, #tpu.dimension_semantics<parallel>], iteration_bounds = array<i64: 2, 2>, scalar_prefetch = 0 : i64, scratch_operands = 0 : i64, tpu.core_type = #tpu.core_type<tc>, window_params = [{transform_indices = @transform_0, window_bounds = array<i64: 1, 36, 128>}, {pipeline_mode = #tpu.pipeline_mode<synchronous>, transform_indices = @transform_1, window_bounds = array<i64: 8, 36>}, {transform_indices = @transform_2, window_bounds = array<i64: 1, 8, 128>}, {transform_indices = @transform_3, window_bounds = array<i64: 1, 1, 8, 1>}, {transform_indices = @transform_4, window_bounds = array<i64: 1, 1, 8, 1>}]} {
    %c0 = arith.constant 0 : index
    %c0_0 = arith.constant 0 : index
    %0 = vector.load %arg3[%c0, %c0_0] : memref<8x36xf32, #tpu.memory_space<vmem>>, vector<8x36xf32>
    %c0_1 = arith.constant 0 : index
    %c0_2 = arith.constant 0 : index
    %c0_3 = arith.constant 0 : index
    %1 = vector.load %arg2[%c0_1, %c0_2, %c0_3] : memref<1x36x128xf32, #tpu.memory_space<vmem>>, vector<1x36x128xf32>
    %2 = vector.shape_cast %1 : vector<1x36x128xf32> to vector<36x128xf32>
    %cst = arith.constant dense<0.000000e+00> : vector<8x128xf32>
    %3 = tpu.matmul %0, %2, %cst {dimension_numbers = #tpu.dot_dimension_numbers<[1], [0], [0], [1], [0, 0, 1, 1], [], []>} : vector<8x36xf32>, vector<36x128xf32>, vector<8x128xf32> -> vector<8x128xf32>
    %cst_4 = arith.constant dense<0.000000e+00> : vector<8xf32>
    %4 = vector.multi_reduction <add>, %3, %cst_4 [1] : vector<8x128xf32> to vector<8xf32>
    %5 = vector.shape_cast %4 : vector<8xf32> to vector<8x1xf32>
    %cst_5 = arith.constant 7.812500e-03 : f32
    %6 = vector.broadcast %cst_5 : f32 to vector<8x1xf32>
    %7 = arith.mulf %5, %6 : vector<8x1xf32>
    %8 = vector.broadcast %7 : vector<8x1xf32> to vector<8x128xf32>
    %9 = arith.subf %3, %8 : vector<8x128xf32>
    %10 = arith.mulf %9, %9 : vector<8x128xf32>
    %cst_6 = arith.constant dense<0.000000e+00> : vector<8xf32>
    %11 = vector.multi_reduction <add>, %10, %cst_6 [1] : vector<8x128xf32> to vector<8xf32>
    %12 = vector.shape_cast %11 : vector<8xf32> to vector<8x1xf32>
    %c0_7 = arith.constant 0 : index
    %c0_8 = arith.constant 0 : index
    %c0_9 = arith.constant 0 : index
    %c0_10 = arith.constant 0 : index
    %13 = vector.load %arg5[%c0_7, %c0_8, %c0_9, %c0_10] : memref<1x1x8x1xf32, #tpu.memory_space<vmem>>, vector<1x1x8x1xf32>
    %14 = vector.shape_cast %13 : vector<1x1x8x1xf32> to vector<8x1xf32>
    %15 = vector.shape_cast %5 : vector<8x1xf32> to vector<1x1x8x1xf32>
    tpu.vector_store %arg5[%c0_7, %c0_8, %c0_9, %c0_10], %15 {strides = array<i32>} : memref<1x1x8x1xf32, #tpu.memory_space<vmem>>, vector<1x1x8x1xf32>,
    %c0_11 = arith.constant 0 : index
    %c0_12 = arith.constant 0 : index
    %c0_13 = arith.constant 0 : index
    %c0_14 = arith.constant 0 : index
    %16 = vector.load %arg6[%c0_11, %c0_12, %c0_13, %c0_14] : memref<1x1x8x1xf32, #tpu.memory_space<vmem>>, vector<1x1x8x1xf32>
    %17 = vector.shape_cast %16 : vector<1x1x8x1xf32> to vector<8x1xf32>
    %18 = vector.shape_cast %12 : vector<8x1xf32> to vector<1x1x8x1xf32>
    tpu.vector_store %arg6[%c0_11, %c0_12, %c0_13, %c0_14], %18 {strides = array<i32>} : memref<1x1x8x1xf32, #tpu.memory_space<vmem>>, vector<1x1x8x1xf32>,
    %c0_15 = arith.constant 0 : index
    %c0_16 = arith.constant 0 : index
    %c0_17 = arith.constant 0 : index
    %19 = vector.load %arg4[%c0_15, %c0_16, %c0_17] : memref<1x8x128xf32, #tpu.memory_space<vmem>>, vector<1x8x128xf32>
    %20 = vector.shape_cast %19 : vector<1x8x128xf32> to vector<8x128xf32>
    %21 = vector.shape_cast %3 : vector<8x128xf32> to vector<1x8x128xf32>
    tpu.vector_store %arg4[%c0_15, %c0_16, %c0_17], %21 {strides = array<i32>} : memref<1x8x128xf32, #tpu.memory_space<vmem>>, vector<1x8x128xf32>,
    return
  }
  func.func @transform_0(%arg0: i32, %arg1: i32) -> (i32, i32, i32) {
    %c0_i32 = arith.constant 0 : i32
    %c0_i32_0 = arith.constant 0 : i32
    return %arg0, %c0_i32, %arg1 : i32, i32, i32
  }
  func.func @transform_1(%arg0: i32, %arg1: i32) -> (i32, i32) {
    %c0_i32 = arith.constant 0 : i32
    %c0_i32_0 = arith.constant 0 : i32
    %c0_i32_1 = arith.constant 0 : i32
    return %c0_i32, %c0_i32_0 : i32, i32
  }
  func.func @transform_2(%arg0: i32, %arg1: i32) -> (i32, i32, i32) {
    %c0_i32 = arith.constant 0 : i32
    %c0_i32_0 = arith.constant 0 : i32
    return %arg0, %c0_i32, %arg1 : i32, i32, i32
  }
  func.func @transform_3(%arg0: i32, %arg1: i32) -> (i32, i32, i32, i32) {
    %c0_i32 = arith.constant 0 : i32
    %c0_i32_0 = arith.constant 0 : i32
    %c0_i32_1 = arith.constant 0 : i32
    return %arg0, %arg1, %c0_i32, %c0_i32_0 : i32, i32, i32, i32
  }
  func.func @transform_4(%arg0: i32, %arg1: i32) -> (i32, i32, i32, i32) {
    %c0_i32 = arith.constant 0 : i32
    %c0_i32_0 = arith.constant 0 : i32
    %c0_i32_1 = arith.constant 0 : i32
    return %arg0, %arg1, %c0_i32, %c0_i32_0 : i32, i32, i32, i32
  }
}

</mosaic_0001>

<llo_original>
// kernel: conv_bn_relu.1
$region0: #{conv_bn_relu.1}
  #allocation0 [shape = 'u32[]', space=smem, size = 0x4, offset = 0x4, fixed_abs, tag = 'smem constant byte address 0x4 - core index']
  #allocation1 [shape = 'u32[144,128]{1,0:T(1,128)}', space=vmem, size = 0x12000, scoped, tag = 'internal scratch']
  %s0 = inlined_call_operand.vmem [shape: f32[2,36,256], index: 0, kind: input, shape index: {}]
  %s1 = inlined_call_operand.vmem [shape: f32[8,36], index: 1, kind: input, shape index: {}]
  %s2 = inlined_call_operand.vmem [shape: f32[2,8,256], index: 2, kind: output, shape index: {0}]
  %s3 = inlined_call_operand.vmem [shape: f32[2,2,8,1], index: 3, kind: output, shape index: {1}]
  %s4 = inlined_call_operand.vmem [shape: f32[2,2,8,1], index: 4, kind: output, shape index: {2}]
  %5 = xla_tuple %s2, %s3, %s4
  %s6 = sld [smem:[#allocation0]]
  $region95: #{conv_bn_relu.1} parent=0
    _
  %s8 = ssub.s32 1, %s6
  %s9 = scalar_select 0, %s8, %s6
  $region1: #{conv_bn_relu.1} parent=0
    #allocation2 [shape = 'u8[40960]{0}', space=vmem, size = 0xa000, scoped, tag = 'input window, operand 0']
    loop: start=0, step=1, limit=6
    $region2: #{conv_bn_relu.1} parent=1 // loop_pre_header
      _
    $region3: #{conv_bn_relu.1} parent=1 // loop_header
      %s11 = sphi 0, %s15
      %p12 = scmp.ge.s32.totalorder %s11, 6
      %s18 = sphi 0, %s30
      %s19 = sphi 0, %s26
      %s20 = sphi 0, %s18
      %s21 = sphi 0, %s19
      %s22 = sphi 0, %s20
      %s23 = sphi 0, %s21
      %s35 = sphi 0, %s37
      %s38 = sphi 0, %s35
      %s39 = sphi 0, %s38
      %s55 = sphi 0, %s39
      %s59 = sphi 0, %s59
      %s61 = sphi 0, %s59
      %s62 = sphi 0, %s61
      %s76 = sphi 0, %s62
      %s84 = sphi 0, %s86
      %s87 = sphi 0, %s84
      %s88 = sphi 0, %s87
      %s104 = sphi 0, %s88
      %s112 = sphi 0, %s114
      %s115 = sphi 0, %s112
      %s116 = sphi 0, %s115
      %s132 = sphi 0, %s116
      %s140 = sphi 0, %s142
      %s143 = sphi 0, %s140
      %s144 = sphi 0, %s143
      %s160 = sphi 0, %s144
    $region4: #{conv_bn_relu.1} parent=1 // loop_header_branch
      %14 = sbr.rel (%p12) target = $region8
    $region5: #{conv_bn_relu.1} parent=1 // loop_body
      %s16 = ssub.s32 %s11, 1
      %s17 = ssub.s32 %s11, 2
      %s24 = sadd.s32 1, %s19
      %p25 = scmp.ge.s32.totalorder %s24, 2
      %s26 = scalar_select %p25, 0, %s24
      %s27 = sadd.s32 1, %s18
      %s28 = scalar_select %p25, %s27, %s18
      %p29 = scmp.ge.s32.totalorder %s28, 2
      %s30 = scalar_select %p29, 0, %s28
      %s31 = ssub.s32 %s18, %s30
      %s32 = ssub.s32 %s19, %s26
      %s33 = sor.u32 %s31, %s32
      %p34 = scmp.eq.s32.totalorder %s33, 0
      %s36 = sadd.s32 %s35, 1
      %s37 = scalar_select %p34, %s35, %s36
      %p40 = pneg %p34
      %p41 = scmp.eq.s32.totalorder %s11, 3
      %p42 = por %p40, %p41
      %p43 = scmp.ne.s32.totalorder %s35, %s38
      %p44 = scmp.eq.s32.totalorder %s11, 0
      %p45 = por %p43, %p44
      %p46 = scmp.ne.s32.totalorder %s35, %s38
      %p47 = scmp.eq.s32.totalorder %s16, 3
      %p48 = por %p46, %p47
      %p49 = scmp.ne.s32.totalorder %s38, %s39
      %p50 = scmp.eq.s32.totalorder %s16, 0
      %p51 = por %p49, %p50
      %p52 = scmp.ne.s32.totalorder %s38, %s39
      %p53 = scmp.eq.s32.totalorder %s17, 3
      %p54 = por %p52, %p53
      %p56 = scmp.ne.s32.totalorder %s39, %s55
      %p57 = scmp.eq.s32.totalorder %s17, 0
      %p58 = por %p56, %p57
      %s60 = sadd.s32 %s59, 1
      %p63 = scmp.eq.s32.totalorder %s11, 3
      %p64 = scmp.ne.s32.totalorder %s59, %s61
      %p65 = scmp.eq.s32.totalorder %s11, 0
      %p66 = por %p64, %p65
      %p67 = scmp.ne.s32.totalorder %s59, %s61
      %p68 = scmp.eq.s32.totalorder %s16, 3
      %p69 = por %p67, %p68
      %p70 = scmp.ne.s32.totalorder %s61, %s62
      %p71 = scmp.eq.s32.totalorder %s16, 0
      %p72 = por %p70, %p71
      %p73 = scmp.ne.s32.totalorder %s61, %s62
      %p74 = scmp.eq.s32.totalorder %s17, 3
      %p75 = por %p73, %p74
      %p77 = scmp.ne.s32.totalorder %s62, %s76
      %p78 = scmp.eq.s32.totalorder %s17, 0
      %p79 = por %p77, %p78
      %s80 = ssub.s32 %s18, %s30
      %s81 = ssub.s32 %s19, %s26
      %s82 = sor.u32 %s80, %s81
      %p83 = scmp.eq.s32.totalorder %s82, 0
      %s85 = sadd.s32 %s84, 1
      %s86 = scalar_select %p83, %s84, %s85
      %p89 = pneg %p83
      %p90 = scmp.eq.s32.totalorder %s11, 3
      %p91 = por %p89, %p90
      %p92 = scmp.ne.s32.totalorder %s84, %s87
      %p93 = scmp.eq.s32.totalorder %s11, 0
      %p94 = por %p92, %p93
      %p95 = scmp.ne.s32.totalorder %s84, %s87
      %p96 = scmp.eq.s32.totalorder %s16, 3
      %p97 = por %p95, %p96
      %p98 = scmp.ne.s32.totalorder %s87, %s88
      %p99 = scmp.eq.s32.totalorder %s16, 0
      %p100 = por %p98, %p99
      %p101 = scmp.ne.s32.totalorder %s87, %s88
      %p102 = scmp.eq.s32.totalorder %s17, 3
      %p103 = por %p101, %p102
      %p105 = scmp.ne.s32.totalorder %s88, %s104
      %p106 = scmp.eq.s32.totalorder %s17, 0
      %p107 = por %p105, %p106
      %s108 = ssub.s32 %s18, %s30
      %s109 = ssub.s32 %s19, %s26
      %s110 = sor.u32 %s108, %s109
      %p111 = scmp.eq.s32.totalorder %s110, 0
      %s113 = sadd.s32 %s112, 1
      %s114 = scalar_select %p111, %s112, %s113
      %p117 = pneg %p111
      %p118 = scmp.eq.s32.totalorder %s11, 3
      %p119 = por %p117, %p118
      %p120 = scmp.ne.s32.totalorder %s112, %s115
      %p121 = scmp.eq.s32.totalorder %s11, 0
      %p122 = por %p120, %p121
      %p123 = scmp.ne.s32.totalorder %s112, %s115
      %p124 = scmp.eq.s32.totalorder %s16, 3
      %p125 = por %p123, %p124
      %p126 = scmp.ne.s32.totalorder %s115, %s116
      %p127 = scmp.eq.s32.totalorder %s16, 0
      %p128 = por %p126, %p127
      %p129 = scmp.ne.s32.totalorder %s115, %s116
      %p130 = scmp.eq.s32.totalorder %s17, 3
      %p131 = por %p129, %p130
      %p133 = scmp.ne.s32.totalorder %s116, %s132
      %p134 = scmp.eq.s32.totalorder %s17, 0
      %p135 = por %p133, %p134
      %s136 = ssub.s32 %s18, %s30
      %s137 = ssub.s32 %s19, %s26
      %s138 = sor.u32 %s136, %s137
      %p139 = scmp.eq.s32.totalorder %s138, 0
      %s141 = sadd.s32 %s140, 1
      %s142 = scalar_select %p139, %s140, %s141
      %p145 = pneg %p139
      %p146 = scmp.eq.s32.totalorder %s11, 3
      %p147 = por %p145, %p146
      %p148 = scmp.ne.s32.totalorder %s140, %s143
      %p149 = scmp.eq.s32.totalorder %s11, 0
      %p150 = por %p148, %p149
      %p151 = scmp.ne.s32.totalorder %s140, %s143
      %p152 = scmp.eq.s32.totalorder %s16, 3
      %p153 = por %p151, %p152
      %p154 = scmp.ne.s32.totalorder %s143, %s144
      %p155 = scmp.eq.s32.totalorder %s16, 0
      %p156 = por %p154, %p155
      %p157 = scmp.ne.s32.totalorder %s143, %s144
      %p158 = scmp.eq.s32.totalorder %s17, 3
      %p159 = por %p157, %p158
      %p161 = scmp.ne.s32.totalorder %s144, %s160
      %p162 = scmp.eq.s32.totalorder %s17, 0
      %p163 = por %p161, %p162
      %p164 = scmp.le.s32.totalorder 1, %s11
      %p165 = scmp.lt.s32.totalorder %s11, 5
      %p166 = pnand %p164, %p165
      %p167 = pneg %p166
      // Predicated region
      $region9: #{conv_bn_relu.1} parent=5 // pred_check
        _
      $region10: #{conv_bn_relu.1} parent=5 // pred_check_branch
        %169 = sbr.rel (%p166) target = $region12
      $region11: #{conv_bn_relu.1} parent=5 // pred_region
        %s170 = ssub.s32 %s11, 1
        // Predicated region
        $region13: #{conv_bn_relu.1} parent=11 // pred_check
          %p171 = pneg %p72
        $region14: #{conv_bn_relu.1} parent=11 // pred_check_branch
          %173 = sbr.rel (%p171) target = $region16
        $region15: #{conv_bn_relu.1} parent=11 // pred_region
          _
        $region16: #{conv_bn_relu.1} parent=11 // pred_fallthru
          _
      $region12: #{conv_bn_relu.1} parent=5 // pred_fallthru
        _
      %p174 = scmp.lt.s32.totalorder %s11, 4
      // Predicated region
      $region17: #{conv_bn_relu.1} parent=5 // pred_check
        %p175 = pneg %p174
      $region18: #{conv_bn_relu.1} parent=5 // pred_check_branch
        %177 = sbr.rel (%p175) target = $region20
      $region19: #{conv_bn_relu.1} parent=5 // pred_region
        // Predicated region
        $region21: #{conv_bn_relu.1} parent=19 // pred_check
          %p178 = pneg %p45
        $region22: #{conv_bn_relu.1} parent=19 // pred_check_branch
          %180 = sbr.rel (%p178) target = $region24
        $region23: #{conv_bn_relu.1} parent=19 // pred_region
          %s181 = sand.u32 %s35, 1
          %s182 = sand.u32 %s35, 1
          %s183 = smul.addr %s182, 40
          %s184 = scalar_lea.vmem [#allocation2], %s183
          %s185 = smul.addr %s18, 10
          %s186 = sadd.s32 %s19, %s185
          %s187 = smul.addr %s186, 8
          %s188 = scalar_lea.vmem %s0, %s187
          // Predicated region
          $region25: #{conv_bn_relu.1} parent=23 // pred_check
            _
          $region26: #{conv_bn_relu.1} parent=23 // pred_check_branch
            %190 = sbr.rel (0) target = $region28
          $region27: #{conv_bn_relu.1} parent=23 // pred_region
            // Predicated region
            $region29: #{conv_bn_relu.1} parent=27 // pred_check
              _
            $region30: #{conv_bn_relu.1} parent=27 // pred_check_branch
              %192 = sbr.rel (0) target = $region32
            $region31: #{conv_bn_relu.1} parent=27 // pred_region
              // Predicated region
              $region44: #{conv_bn_relu.1} parent=31 // pred_check
                _
              $region45: #{conv_bn_relu.1} parent=31 // pred_check_branch
                %216 = sbr.rel (0) target = $region47
              $region46: #{conv_bn_relu.1} parent=31 // pred_region
                loop: start=0, step=1, limit=1
                $region48: #{conv_bn_relu.1} parent=46 // loop_pre_header
                  _
                $region49: #{conv_bn_relu.1} parent=46 // loop_header
                  %s218 = sphi 0, %s222
                  %p219 = scmp.ge.s32.totalorder %s218, 1
                  %s223 = sphi %s188, %s188
                  %s224 = sphi %s184, %s184
                $region50: #{conv_bn_relu.1} parent=46 // loop_header_branch
                  %221 = sbr.rel (%p219) target = $region54
                $region51: #{conv_bn_relu.1} parent=46 // loop_body
                  %v225 = vld [vmem:[%s223] sm:$0xff]
                  %226 = vst [vmem:[%s224] sm:$0xff] %v225
                  %v227 = vld [vmem:[%s223 + $0x10] sm:$0xff]
                  %228 = vst [vmem:[%s224 + $0x8] sm:$0xff] %v227
                  %v229 = vld [vmem:[%s223 + $0x20] sm:$0xff]
                  %230 = vst [vmem:[%s224 + $0x10] sm:$0xff] %v229
                  %v231 = vld [vmem:[%s223 + $0x30] sm:$0xff]
                  %232 = vst [vmem:[%s224 + $0x18] sm:$0xff] %v231
                  %v233 = vld [vmem:[%s223 + $0x40] sm:$0xff]
                  %234 = vst [vmem:[%s224 + $0x20] sm:$0xff] %v233
                $region52: #{conv_bn_relu.1} parent=46 // loop_footer
                  %s222 = sadd.s32 1, %s218
                $region53: #{conv_bn_relu.1} parent=46 // loop_footer_branch
                  %217 = sbr.rel target = $region49
                $region54: #{conv_bn_relu.1} parent=46 // loop_exit
                  _
              $region47: #{conv_bn_relu.1} parent=31 // pred_fallthru
                _
              // Predicated region
              $region55: #{conv_bn_relu.1} parent=31 // pred_check
                _
              $region56: #{conv_bn_relu.1} parent=31 // pred_check_branch
                %236 = sbr.rel target = $region58
              $region57: #{conv_bn_relu.1} parent=31 // pred_region
                _
              $region58: #{conv_bn_relu.1} parent=31 // pred_fallthru
                _
            $region32: #{conv_bn_relu.1} parent=27 // pred_fallthru
              _
            // Predicated region
            $region33: #{conv_bn_relu.1} parent=27 // pred_check
              _
            $region34: #{conv_bn_relu.1} parent=27 // pred_check_branch
              %194 = sbr.rel target = $region36
            $region35: #{conv_bn_relu.1} parent=27 // pred_region
              %s196 = ssub.s32 256, 1
              loop: start=0, step=1, limit=1
              $region37: #{conv_bn_relu.1} parent=35 // loop_pre_header
                _
              $region38: #{conv_bn_relu.1} parent=35 // loop_header
                %s198 = sphi 0, %s202
                %p199 = scmp.ge.s32.totalorder %s198, 1
                %s203 = sphi %s188, %s188
                %s204 = sphi %s184, %s184
              $region39: #{conv_bn_relu.1} parent=35 // loop_header_branch
                %201 = sbr.rel (%p199) target = $region43
              $region40: #{conv_bn_relu.1} parent=35 // loop_body
                %v205 = vld [vmem:[%s203] sm:%s196]
                %206 = vst [vmem:[%s204] sm:%s196] %v205
                %v207 = vld [vmem:[%s203 + $0x10] sm:%s196]
                %208 = vst [vmem:[%s204 + $0x8] sm:%s196] %v207
                %v209 = vld [vmem:[%s203 + $0x20] sm:%s196]
                %210 = vst [vmem:[%s204 + $0x10] sm:%s196] %v209
                %v211 = vld [vmem:[%s203 + $0x30] sm:%s196]
                %212 = vst [vmem:[%s204 + $0x18] sm:%s196] %v211
                %v213 = vld [vmem:[%s203 + $0x40] sm:%s196]
                %214 = vst [vmem:[%s204 + $0x20] sm:%s196] %v213
              $region41: #{conv_bn_relu.1} parent=35 // loop_footer
                %s202 = sadd.s32 1, %s198
              $region42: #{conv_bn_relu.1} parent=35 // loop_footer_branch
                %197 = sbr.rel target = $region38
              $region43: #{conv_bn_relu.1} parent=35 // loop_exit
                _
            $region36: #{conv_bn_relu.1} parent=27 // pred_fallthru
              _
          $region28: #{conv_bn_relu.1} parent=23 // pred_fallthru
            _
          %237 = vnop
        $region24: #{conv_bn_relu.1} parent=19 // pred_fallthru
          _
      $region20: #{conv_bn_relu.1} parent=5 // pred_fallthru
        _
      %p238 = scmp.le.s32.totalorder 1, %s11
      %p239 = scmp.lt.s32.totalorder %s11, 5
      %p240 = pnand %p238, %p239
      %p241 = pneg %p240
      // Predicated region
      $region59: #{conv_bn_relu.1} parent=5 // pred_check
        _
      $region60: #{conv_bn_relu.1} parent=5 // pred_check_branch
        %243 = sbr.rel (%p240) target = $region62
      $region61: #{conv_bn_relu.1} parent=5 // pred_region
        %s244 = ssub.s32 %s11, 1
        %s245 = sand.u32 %s38, 1
        %s246 = sand.u32 %s38, 1
        %s247 = smul.addr %s246, 40
        %s248 = scalar_lea.vmem [#allocation2], %s247
        // Predicated region
        $region63: #{conv_bn_relu.1} parent=61 // pred_check
          %p249 = pneg %p51
        $region64: #{conv_bn_relu.1} parent=61 // pred_check_branch
          %251 = sbr.rel (%p249) target = $region66
        $region65: #{conv_bn_relu.1} parent=61 // pred_region
          _
        $region66: #{conv_bn_relu.1} parent=61 // pred_fallthru
          _
        %s252 = sand.u32 %s38, 1
        %s253 = sand.u32 %s38, 1
        %s254 = smul.addr %s253, 40
        %s255 = scalar_lea.vmem [#allocation2], %s254
        %p256 = pneg %p51
        %p257 = pneg %p48
        %p258 = pneg %p72
        %p259 = pneg %p69
        %p260 = pneg %p100
        %p261 = pneg %p97
        %p262 = scmp.lt.s32.totalorder %s20, 1
        %s263 = scalar_select %p262, %s20, 1
        %p264 = scmp.lt.s32.totalorder %s21, 1
        %s265 = scalar_select %p264, %s21, 1
        %s266 = smul.addr %s263, 2
        %s267 = sadd.s32 %s265, %s266
        %s268 = smul.addr %s267, 8
        %s269 = scalar_lea.vmem %s2, %s268
        %p270 = pneg %p128
        %p271 = pneg %p125
        %p272 = scmp.lt.s32.totalorder %s20, 1
        %s273 = scalar_select %p272, %s20, 1
        %p274 = scmp.lt.s32.totalorder %s21, 1
        %s275 = scalar_select %p274, %s21, 1
        %s276 = smul.addr %s273, 2
        %s277 = sadd.s32 %s275, %s276
        %s278 = smul.addr %s277, 8
        %s279 = scalar_lea.vmem %s3, %s278
        %p280 = pneg %p156
        %p281 = pneg %p153
        %p282 = scmp.lt.s32.totalorder %s20, 1
        %s283 = scalar_select %p282, %s20, 1
        %p284 = scmp.lt.s32.totalorder %s21, 1
        %s285 = scalar_select %p284, %s21, 1
        %s286 = smul.addr %s283, 2
        %s287 = sadd.s32 %s285, %s286
        %s288 = smul.addr %s287, 8
        %s289 = scalar_lea.vmem %s4, %s288
        %p290 = scmp.lt.s32.totalorder %s20, 1
        %s291 = scalar_select %p290, %s20, 1
        %p292 = scmp.lt.s32.totalorder %s21, 1
        %s293 = scalar_select %p292, %s21, 1
        %s294 = smul.addr %s291, 2
        %s295 = sadd.s32 %s293, %s294
        %s296 = smul.addr %s295, 8
        %s297 = scalar_lea.vmem %s2, %s296
        %p298 = scmp.lt.s32.totalorder %s20, 1
        %s299 = scalar_select %p298, %s20, 1
        %p300 = scmp.lt.s32.totalorder %s21, 1
        %s301 = scalar_select %p300, %s21, 1
        %s302 = smul.addr %s299, 2
        %s303 = sadd.s32 %s301, %s302
        %s304 = smul.addr %s303, 8
        %s305 = scalar_lea.vmem %s3, %s304
        %p306 = scmp.lt.s32.totalorder %s20, 1
        %s307 = scalar_select %p306, %s20, 1
        %p308 = scmp.lt.s32.totalorder %s21, 1
        %s309 = scalar_select %p308, %s21, 1
        %s310 = smul.addr %s307, 2
        %s311 = sadd.s32 %s309, %s310
        %s312 = smul.addr %s311, 8
        %s313 = scalar_lea.vmem %s4, %s312
        %v314 = vld [vmem:[%s1] sm:$0xff]
        %v315 = vld [vmem:[%s248] sm:$0xff]
        %v316 = vld [vmem:[%s248 + $0x8] sm:$0xff]
        %v317 = vld [vmem:[%s248 + $0x10] sm:$0xff]
        %v318 = vld [vmem:[%s248 + $0x18] sm:$0xff]
        %v319 = vld [vmem:[%s248 + $0x20] sm:$0xf]
        %vm320 = vcmask 293888
        %v322 = vsel %vm320, %v314, 0
        %vm324 = vcmask 1043456
        %v326 = vsel %vm324, %v319, 0
        %328 = vmatprep.subr.mxu0 0.0
        %329 = vmatpush1.msra.mxu0 0.0
        %330 = vmatprep.subr.mxu0 0.0
        %331 = vmatpush1.msra.mxu0 0.0
        %332 = vmatprep.subr.mxu0 0.0
        %333 = vmatpush1.msra.mxu0 0.0
        %334 = vmatprep.subr.mxu0 0.0
        %335 = vmatpush1.msra.mxu0 0.0
        %336 = vmatprep.subr.mxu0 0.0
        %337 = vmatpush1.msra.mxu0 0.0
        %338 = vmatprep.subr.mxu0 0.0
        %339 = vmatpush1.msra.mxu0 0.0
        %340 = vmatprep.subr.mxu0 0.0
        %341 = vmatpush1.msra.mxu0 0.0
        %342 = vmatprep.subr.mxu0 0.0
        %343 = vmatpush1.msra.mxu0 0.0
        %344 = vmatprep.subr.mxu0 0.0
        %345 = vmatpush1.msra.mxu0 0.0
        %346 = vmatprep.subr.mxu0 0.0
        %347 = vmatpush1.msra.mxu0 0.0
        %348 = vmatprep.subr.mxu0 0.0
        %349 = vmatpush1.msra.mxu0 0.0
        %350 = vmatprep.subr.mxu0 0.0
        %351 = vmatpush1.msra.mxu0 %v326
        %352 = vmatprep.subr.mxu0 0.0
        %353 = vmatpush1.msra.mxu0 %v318
        %354 = vmatprep.subr.mxu0 0.0
        %355 = vmatpush1.msra.mxu0 %v317
        %356 = vmatprep.subr.mxu0 0.0
        %357 = vmatpush1.msra.mxu0 %v316
        %358 = vmatprep.subr.mxu0 0.0
        %359 = vmatpush1.msra.mxu0 %v315
        %360 = vmatprep.subr.mxu0 0.0
        %361 = vmatpush2.msra.mxu0 0.0
        %362 = vmatprep.subr.mxu0 0.0
        %363 = vmatpush2.msra.mxu0 0.0
        %364 = vmatprep.subr.mxu0 0.0
        %365 = vmatpush2.msra.mxu0 0.0
        %366 = vmatprep.subr.mxu0 0.0
        %367 = vmatpush2.msra.mxu0 0.0
        %368 = vmatprep.subr.mxu0 0.0
        %369 = vmatpush2.msra.mxu0 0.0
        %370 = vmatprep.subr.mxu0 0.0
        %371 = vmatpush2.msra.mxu0 0.0
        %372 = vmatprep.subr.mxu0 0.0
        %373 = vmatpush2.msra.mxu0 0.0
        %374 = vmatprep.subr.mxu0 0.0
        %375 = vmatpush2.msra.mxu0 0.0
        %376 = vmatprep.subr.mxu0 0.0
        %377 = vmatpush2.msra.mxu0 0.0
        %378 = vmatprep.subr.mxu0 0.0
        %379 = vmatpush2.msra.mxu0 0.0
        %380 = vmatprep.subr.mxu0 0.0
        %381 = vmatpush2.msra.mxu0 0.0
        %382 = vmatprep.subr.mxu0 0.0
        %383 = vmatpush2.msra.mxu0 0.0
        %384 = vmatprep.subr.mxu0 0.0
        %385 = vmatpush2.msra.mxu0 0.0
        %386 = vmatprep.subr.mxu0 0.0
        %387 = vmatpush2.msra.mxu0 0.0
        %388 = vmatprep.subr.mxu0 0.0
        %389 = vmatpush2.msra.mxu0 0.0
        %390 = vmatprep.subr.mxu0 0.0
        %391 = vmatpush2.msra.mxu0 0.0
        %392 = vmatprep.mubr.f32.mxu0 0.0
        %393 = vmatmul.mubr.f32.gmra.mxu0 %v322
        %v394 = vpop.f32.mrf.mxu0
        %v395 = vadd.f32 0.0, %v394
        %v396 = vpop.f32.mrf.mxu0
        %397 = vdwg.mxu0
        %398 = vadd.xlane.f32.xlu0 %v395
        %v399 = vpop.xlane.xlu0 %398
        %v400 = vmul.f32 %v399, 0.0078125
        %v401 = vsub.f32 %v395, %v400
        %v402 = vmul.f32 %v401, %v401
        %403 = vadd.xlane.f32.xlu0 %v402
        %v404 = vpop.xlane.xlu0 %403
        %vm405 = vcmask 7168
        %406 = vst.msk [vmem:[%s305] sm:$0xff] %vm405, %v399
        %407 = vst.msk [vmem:[%s313] sm:$0xff] %vm405, %v404
        %408 = vst [vmem:[%s297] sm:$0xff] %v395
        %p409 = scmp.lt.s32.totalorder %s20, 1
        %s410 = scalar_select %p409, %s20, 1
        %p411 = scmp.lt.s32.totalorder %s21, 1
        %s412 = scalar_select %p411, %s21, 1
        %s413 = smul.addr %s410, 2
        %s414 = sadd.s32 %s412, %s413
        %s415 = smul.addr %s414, 8
        %s416 = scalar_lea.vmem %s2, %s415
        %p417 = scmp.lt.s32.totalorder %s20, 1
        %s418 = scalar_select %p417, %s20, 1
        %p419 = scmp.lt.s32.totalorder %s21, 1
        %s420 = scalar_select %p419, %s21, 1
        %s421 = smul.addr %s418, 2
        %s422 = sadd.s32 %s420, %s421
        %s423 = smul.addr %s422, 8
        %s424 = scalar_lea.vmem %s3, %s423
        %p425 = scmp.lt.s32.totalorder %s20, 1
        %s426 = scalar_select %p425, %s20, 1
        %p427 = scmp.lt.s32.totalorder %s21, 1
        %s428 = scalar_select %p427, %s21, 1
        %s429 = smul.addr %s426, 2
        %s430 = sadd.s32 %s428, %s429
        %s431 = smul.addr %s430, 8
        %s432 = scalar_lea.vmem %s4, %s431
        // Predicated region
        $region67: #{conv_bn_relu.1} parent=61 // pred_check
          %p433 = pneg %p97
        $region68: #{conv_bn_relu.1} parent=61 // pred_check_branch
          %435 = sbr.rel (%p433) target = $region70
        $region69: #{conv_bn_relu.1} parent=61 // pred_region
          _
        $region70: #{conv_bn_relu.1} parent=61 // pred_fallthru
          _
        // Predicated region
        $region71: #{conv_bn_relu.1} parent=61 // pred_check
          %p436 = pneg %p125
        $region72: #{conv_bn_relu.1} parent=61 // pred_check_branch
          %438 = sbr.rel (%p436) target = $region74
        $region73: #{conv_bn_relu.1} parent=61 // pred_region
          _
        $region74: #{conv_bn_relu.1} parent=61 // pred_fallthru
          _
        // Predicated region
        $region75: #{conv_bn_relu.1} parent=61 // pred_check
          %p439 = pneg %p153
        $region76: #{conv_bn_relu.1} parent=61 // pred_check_branch
          %441 = sbr.rel (%p439) target = $region78
        $region77: #{conv_bn_relu.1} parent=61 // pred_region
          _
        $region78: #{conv_bn_relu.1} parent=61 // pred_fallthru
          _
      $region62: #{conv_bn_relu.1} parent=5 // pred_fallthru
        _
      %p442 = scmp.le.s32.totalorder 2, %s11
      // Predicated region
      $region79: #{conv_bn_relu.1} parent=5 // pred_check
        %p443 = pneg %p442
      $region80: #{conv_bn_relu.1} parent=5 // pred_check_branch
        %445 = sbr.rel (%p443) target = $region82
      $region81: #{conv_bn_relu.1} parent=5 // pred_region
        %s446 = ssub.s32 %s11, 2
        // Predicated region
        $region83: #{conv_bn_relu.1} parent=81 // pred_check
          %p447 = pneg %p103
        $region84: #{conv_bn_relu.1} parent=81 // pred_check_branch
          %449 = sbr.rel (%p447) target = $region86
        $region85: #{conv_bn_relu.1} parent=81 // pred_region
          %p450 = scmp.lt.s32.totalorder %s22, 1
          %s451 = scalar_select %p450, %s22, 1
          %p452 = scmp.lt.s32.totalorder %s23, 1
          %s453 = scalar_select %p452, %s23, 1
          %s454 = smul.addr %s451, 2
          %s455 = sadd.s32 %s453, %s454
          %s456 = smul.addr %s455, 8
          %s457 = scalar_lea.vmem %s2, %s456
        $region86: #{conv_bn_relu.1} parent=81 // pred_fallthru
          _
        // Predicated region
        $region87: #{conv_bn_relu.1} parent=81 // pred_check
          %p458 = pneg %p131
        $region88: #{conv_bn_relu.1} parent=81 // pred_check_branch
          %460 = sbr.rel (%p458) target = $region90
        $region89: #{conv_bn_relu.1} parent=81 // pred_region
          %p461 = scmp.lt.s32.totalorder %s22, 1
          %s462 = scalar_select %p461, %s22, 1
          %p463 = scmp.lt.s32.totalorder %s23, 1
          %s464 = scalar_select %p463, %s23, 1
          %s465 = smul.addr %s462, 2
          %s466 = sadd.s32 %s464, %s465
          %s467 = smul.addr %s466, 8
          %s468 = scalar_lea.vmem %s3, %s467
        $region90: #{conv_bn_relu.1} parent=81 // pred_fallthru
          _
        // Predicated region
        $region91: #{conv_bn_relu.1} parent=81 // pred_check
          %p469 = pneg %p159
        $region92: #{conv_bn_relu.1} parent=81 // pred_check_branch
          %471 = sbr.rel (%p469) target = $region94
        $region93: #{conv_bn_relu.1} parent=81 // pred_region
          %p472 = scmp.lt.s32.totalorder %s22, 1
          %s473 = scalar_select %p472, %s22, 1
          %p474 = scmp.lt.s32.totalorder %s23, 1
          %s475 = scalar_select %p474, %s23, 1
          %s476 = smul.addr %s473, 2
          %s477 = sadd.s32 %s475, %s476
          %s478 = smul.addr %s477, 8
          %s479 = scalar_lea.vmem %s4, %s478
        $region94: #{conv_bn_relu.1} parent=81 // pred_fallthru
          _
      $region82: #{conv_bn_relu.1} parent=5 // pred_fallthru
        _
    $region6: #{conv_bn_relu.1} parent=1 // loop_footer
      %s15 = sadd.s32 1, %s11
    $region7: #{conv_bn_relu.1} parent=1 // loop_footer_branch
      %10 = sbr.rel target = $region3
    $region8: #{conv_bn_relu.1} parent=1 // loop_exit
      _

</llo_original>
